<compile_context>
chip_gen: v7x
topology: tpu7x:2x2x1
jax: 0.10.0
libtpu: 0.0.40
codegen_flags: <defaults>
</compile_context>

<pallas_src>
import functools

import jax
import jax.numpy as jnp
from jax.experimental import pallas as pl
from jax.experimental.pallas import tpu as pltpu


def _windowed_softmax_kernel(q_ref, k_ref, out_ref, dot_ref, *,
                             ksize, pad, c, t_valid, t_pad, k_sub):
    # q_ref, k_ref: (1, C, T_pad)      query / key tile for batch b
    # out_ref:      (1, K_SUB, T_pad)  softmax weights (extra rows/lanes = junk)
    # dot_ref:      (K_SUB, T_pad)     f32 VMEM scratch holding the dot rows
    q = q_ref[0]      # (C, T_pad)
    kv = k_ref[0]     # (C, T_pad)

    # Window rows that don't exist (k >= ksize) stay at -inf -> exp() == 0.
    dot_ref[...] = jnp.full((k_sub, t_pad), -jnp.inf, dtype=jnp.float32)

    t_idx = jax.lax.broadcasted_iota(jnp.int32, (1, t_pad), 1)

    for k in range(ksize):                              # static window loop
        # Shifted key view: rolled[t] == key[t + k - pad] (mod t_pad); the
        # wrapped lanes are invalidated by the mask below.
        shift = (pad - k) % t_pad
        kv_k = kv if shift == 0 else pltpu.roll(kv, shift=shift, axis=1)
        prod = q * kv_k                                 # (C, T_pad)  VPU muls

        # Channel reduction: VPU adds across 8-sublane groups, then a single
        # cross-sublane (XLU) reduce of 8 sublanes.
        if c % 8 == 0 and c > 8:
            part = prod[0:8, :]
            for g in range(1, c // 8):
                part = part + prod[g * 8:(g + 1) * 8, :]
        else:
            part = prod
        row = jnp.sum(part, axis=0, keepdims=True)      # (1, T_pad)  XLU

        # Validity: key position t + k - pad must lie in [0, T); this also
        # kills the lanes that wrapped around in the roll above.
        pos = t_idx + (k - pad)
        valid = (pos >= 0) & (pos < t_valid)
        dot_ref[pl.ds(k, 1), :] = jnp.where(valid, row, -jnp.inf)

    # Softmax over the window axis (sublanes of the scratch).
    d = dot_ref[...]                                    # (K_SUB, T_pad)
    m = jnp.max(d, axis=0, keepdims=True)               # XLU
    e = jnp.exp(d - m)                                  # EUP
    s = jnp.sum(e, axis=0, keepdims=True)               # XLU
    out_ref[0] = e * pl.reciprocal(s, approx=False)     # EUP + broadcast mul


def windowed_softmax(query, key, kernel_size):
    """query, key: (B, C, T) float32.  Returns (B, kernel_size, T) float32."""
    assert kernel_size % 2 == 1
    B, C, T = query.shape
    pad = kernel_size // 2

    LANES, SUBLANES = 128, 8
    t_pad = pl.cdiv(T, LANES) * LANES
    k_sub = max(SUBLANES, pl.cdiv(kernel_size, SUBLANES) * SUBLANES)

    # Lane-dense inputs: pad time to a multiple of 128 (zeros; masked in-kernel).
    if t_pad != T:
        pad_t = ((0, 0), (0, 0), (0, t_pad - T))
        query = jnp.pad(query, pad_t)
        key = jnp.pad(key, pad_t)

    kernel = functools.partial(
        _windowed_softmax_kernel,
        ksize=kernel_size, pad=pad, c=C, t_valid=T, t_pad=t_pad, k_sub=k_sub)

    cost = pl.CostEstimate(
        flops=2 * B * kernel_size * C * t_pad + 6 * B * k_sub * t_pad,
        transcendentals=B * k_sub * t_pad,
        bytes_accessed=4 * (2 * B * C * t_pad + B * k_sub * t_pad),
    )

    out = pl.pallas_call(
        kernel,
        out_shape=jax.ShapeDtypeStruct((B, k_sub, t_pad), jnp.float32),
        grid_spec=pltpu.PrefetchScalarGridSpec(
            num_scalar_prefetch=0,
            grid=(B,),
            in_specs=[
                pl.BlockSpec((1, C, t_pad), lambda b: (b, 0, 0)),
                pl.BlockSpec((1, C, t_pad), lambda b: (b, 0, 0)),
            ],
            out_specs=pl.BlockSpec((1, k_sub, t_pad), lambda b: (b, 0, 0)),
            scratch_shapes=[pltpu.VMEM((k_sub, t_pad), jnp.float32)],
        ),
        compiler_params=pltpu.CompilerParams(
            # Parallel batch axis -> both TensorCores on v7x; serial loop on
            # single-TC v5e/v6e (fine at this size).
            dimension_semantics=("parallel",),
        ),
        cost_estimate=cost,
    )(query, key)

    # Drop sublane/lane padding (padded time columns may contain NaN).
    return out[:, :kernel_size, :T]


def _reference(query, key, kernel_size):
    # Pure-JAX reference mirroring the PyTorch module, for a sanity check.
    B, C, T = query.shape
    pad = kernel_size // 2
    key_p = jnp.pad(key, ((0, 0), (0, 0), (pad, pad)))
    mask = jnp.pad(jnp.ones((1, 1, T), dtype=bool), ((0, 0), (0, 0), (pad, pad)))
    keys = jnp.stack([key_p[:, :, i:i + T] for i in range(kernel_size)], axis=2)
    masks = jnp.concatenate([mask[:, :, i:i + T] for i in range(kernel_size)], axis=1)
    dot = (keys * query[:, :, None, :]).sum(axis=1)          # (B, K, T)
    dot = jnp.where(masks, dot, -jnp.inf)
    return jax.nn.softmax(dot, axis=1)


if __name__ == "__main__":
    B, C, T = 8, 32, 100       # matches the module spec's (8, 32, 100) inputs
    kernel_size = 5

    k0, k1 = jax.random.split(jax.random.PRNGKey(0))
    query = jax.random.normal(k0, (B, C, T), dtype=jnp.float32)
    key = jax.random.normal(k1, (B, C, T), dtype=jnp.float32)

    out = windowed_softmax(query, key, kernel_size)
    out = jax.block_until_ready(out)

    ref = _reference(query, key, kernel_size)
    assert out.shape == (B, kernel_size, T)
    assert jnp.allclose(out, ref, atol=1e-5, rtol=1e-5)

    print("KERNEL_OK")
</pallas_src>

<mosaic_0001>
module attributes {stable_mosaic.version = 11 : i64} {
  func.func @_windowed_softmax_kernel(%arg0: i32, %arg1: memref<1x32x128xf32, #tpu.memory_space<vmem>>, %arg2: memref<1x32x128xf32, #tpu.memory_space<vmem>>, %arg3: memref<1x8x128xf32, #tpu.memory_space<vmem>>, %arg4: memref<8x128xf32, #tpu.memory_space<vmem>>) attributes {dimension_semantics = [#tpu.dimension_semantics<parallel>], iteration_bounds = array<i64: 8>, scalar_prefetch = 0 : i64, scratch_operands = 1 : i64, tpu.core_type = #tpu.core_type<tc>, window_params = [{transform_indices = @transform_0, window_bounds = array<i64: 1, 32, 128>}, {transform_indices = @transform_1, window_bounds = array<i64: 1, 32, 128>}, {transform_indices = @transform_2, window_bounds = array<i64: 1, 8, 128>}]} {
    %c0 = arith.constant 0 : index
    %c0_0 = arith.constant 0 : index
    %c0_1 = arith.constant 0 : index
    %0 = vector.load %arg1[%c0, %c0_0, %c0_1] : memref<1x32x128xf32, #tpu.memory_space<vmem>>, vector<1x32x128xf32>
    %1 = vector.shape_cast %0 : vector<1x32x128xf32> to vector<32x128xf32>
    %c0_2 = arith.constant 0 : index
    %c0_3 = arith.constant 0 : index
    %c0_4 = arith.constant 0 : index
    %2 = vector.load %arg2[%c0_2, %c0_3, %c0_4] : memref<1x32x128xf32, #tpu.memory_space<vmem>>, vector<1x32x128xf32>
    %3 = vector.shape_cast %2 : vector<1x32x128xf32> to vector<32x128xf32>
    %cst = arith.constant 0xFF800000 : f32
    %4 = vector.broadcast %cst : f32 to vector<8x128xf32>
    %c0_5 = arith.constant 0 : index
    %c0_6 = arith.constant 0 : index
    %5 = vector.load %arg4[%c0_5, %c0_6] : memref<8x128xf32, #tpu.memory_space<vmem>>, vector<8x128xf32>
    tpu.vector_store %arg4[%c0_5, %c0_6], %4 {strides = array<i32>} : memref<8x128xf32, #tpu.memory_space<vmem>>, vector<8x128xf32>,
    %6 = tpu.iota {dimensions = array<i32: 1>} : vector<1x128xi32>
    %c2_i32 = arith.constant 2 : i32
    %7 = tpu.dynamic_rotate %3 by %c2_i32 dim 1 : vector<32x128xf32>, i32 -> vector<32x128xf32>
    %8 = arith.mulf %1, %7 : vector<32x128xf32>
    %9 = vector.extract_strided_slice %8 {offsets = [0, 0], sizes = [8, 128], strides = [1, 1]} : vector<32x128xf32> to vector<8x128xf32>
    %10 = vector.extract_strided_slice %8 {offsets = [8, 0], sizes = [8, 128], strides = [1, 1]} : vector<32x128xf32> to vector<8x128xf32>
    %11 = arith.addf %9, %10 : vector<8x128xf32>
    %12 = vector.extract_strided_slice %8 {offsets = [16, 0], sizes = [8, 128], strides = [1, 1]} : vector<32x128xf32> to vector<8x128xf32>
    %13 = arith.addf %11, %12 : vector<8x128xf32>
    %14 = vector.extract_strided_slice %8 {offsets = [24, 0], sizes = [8, 128], strides = [1, 1]} : vector<32x128xf32> to vector<8x128xf32>
    %15 = arith.addf %13, %14 : vector<8x128xf32>
    %cst_7 = arith.constant dense<0.000000e+00> : vector<128xf32>
    %16 = vector.multi_reduction <add>, %15, %cst_7 [0] : vector<8x128xf32> to vector<128xf32>
    %17 = vector.shape_cast %16 : vector<128xf32> to vector<1x128xf32>
    %c-2_i32 = arith.constant -2 : i32
    %18 = vector.broadcast %c-2_i32 : i32 to vector<1x128xi32>
    %19 = arith.addi %6, %18 : vector<1x128xi32>
    %c0_i32 = arith.constant 0 : i32
    %20 = vector.broadcast %c0_i32 : i32 to vector<1x128xi32>
    %21 = arith.cmpi sge, %19, %20 : vector<1x128xi32>
    %c100_i32 = arith.constant 100 : i32
    %22 = vector.broadcast %c100_i32 : i32 to vector<1x128xi32>
    %23 = arith.cmpi slt, %19, %22 : vector<1x128xi32>
    %24 = arith.andi %21, %23 : vector<1x128xi1>
    %cst_8 = arith.constant 0xFF800000 : f32
    %25 = vector.broadcast %cst_8 : f32 to vector<1x128xf32>
    %26 = arith.select %24, %17, %25 : vector<1x128xi1>, vector<1x128xf32>
    %c0_9 = arith.constant 0 : index
    %c0_10 = arith.constant 0 : index
    %27 = vector.load %arg4[%c0_9, %c0_10] : memref<8x128xf32, #tpu.memory_space<vmem>>, vector<1x128xf32>
    tpu.vector_store %arg4[%c0_9, %c0_10], %26 {strides = array<i32>} : memref<8x128xf32, #tpu.memory_space<vmem>>, vector<1x128xf32>,
    %c1_i32 = arith.constant 1 : i32
    %28 = tpu.dynamic_rotate %3 by %c1_i32 dim 1 : vector<32x128xf32>, i32 -> vector<32x128xf32>
    %29 = arith.mulf %1, %28 : vector<32x128xf32>
    %30 = vector.extract_strided_slice %29 {offsets = [0, 0], sizes = [8, 128], strides = [1, 1]} : vector<32x128xf32> to vector<8x128xf32>
    %31 = vector.extract_strided_slice %29 {offsets = [8, 0], sizes = [8, 128], strides = [1, 1]} : vector<32x128xf32> to vector<8x128xf32>
    %32 = arith.addf %30, %31 : vector<8x128xf32>
    %33 = vector.extract_strided_slice %29 {offsets = [16, 0], sizes = [8, 128], strides = [1, 1]} : vector<32x128xf32> to vector<8x128xf32>
    %34 = arith.addf %32, %33 : vector<8x128xf32>
    %35 = vector.extract_strided_slice %29 {offsets = [24, 0], sizes = [8, 128], strides = [1, 1]} : vector<32x128xf32> to vector<8x128xf32>
    %36 = arith.addf %34, %35 : vector<8x128xf32>
    %cst_11 = arith.constant dense<0.000000e+00> : vector<128xf32>
    %37 = vector.multi_reduction <add>, %36, %cst_11 [0] : vector<8x128xf32> to vector<128xf32>
    %38 = vector.shape_cast %37 : vector<128xf32> to vector<1x128xf32>
    %c-1_i32 = arith.constant -1 : i32
    %39 = vector.broadcast %c-1_i32 : i32 to vector<1x128xi32>
    %40 = arith.addi %6, %39 : vector<1x128xi32>
    %c0_i32_12 = arith.constant 0 : i32
    %41 = vector.broadcast %c0_i32_12 : i32 to vector<1x128xi32>
    %42 = arith.cmpi sge, %40, %41 : vector<1x128xi32>
    %c100_i32_13 = arith.constant 100 : i32
    %43 = vector.broadcast %c100_i32_13 : i32 to vector<1x128xi32>
    %44 = arith.cmpi slt, %40, %43 : vector<1x128xi32>
    %45 = arith.andi %42, %44 : vector<1x128xi1>
    %cst_14 = arith.constant 0xFF800000 : f32
    %46 = vector.broadcast %cst_14 : f32 to vector<1x128xf32>
    %47 = arith.select %45, %38, %46 : vector<1x128xi1>, vector<1x128xf32>
    %c1 = arith.constant 1 : index
    %c0_15 = arith.constant 0 : index
    %48 = vector.load %arg4[%c1, %c0_15] : memref<8x128xf32, #tpu.memory_space<vmem>>, vector<1x128xf32>
    tpu.vector_store %arg4[%c1, %c0_15], %47 {strides = array<i32>} : memref<8x128xf32, #tpu.memory_space<vmem>>, vector<1x128xf32>,
    %49 = arith.mulf %1, %3 : vector<32x128xf32>
    %50 = vector.extract_strided_slice %49 {offsets = [0, 0], sizes = [8, 128], strides = [1, 1]} : vector<32x128xf32> to vector<8x128xf32>
    %51 = vector.extract_strided_slice %49 {offsets = [8, 0], sizes = [8, 128], strides = [1, 1]} : vector<32x128xf32> to vector<8x128xf32>
    %52 = arith.addf %50, %51 : vector<8x128xf32>
    %53 = vector.extract_strided_slice %49 {offsets = [16, 0], sizes = [8, 128], strides = [1, 1]} : vector<32x128xf32> to vector<8x128xf32>
    %54 = arith.addf %52, %53 : vector<8x128xf32>
    %55 = vector.extract_strided_slice %49 {offsets = [24, 0], sizes = [8, 128], strides = [1, 1]} : vector<32x128xf32> to vector<8x128xf32>
    %56 = arith.addf %54, %55 : vector<8x128xf32>
    %cst_16 = arith.constant dense<0.000000e+00> : vector<128xf32>
    %57 = vector.multi_reduction <add>, %56, %cst_16 [0] : vector<8x128xf32> to vector<128xf32>
    %58 = vector.shape_cast %57 : vector<128xf32> to vector<1x128xf32>
    %c0_i32_17 = arith.constant 0 : i32
    %59 = vector.broadcast %c0_i32_17 : i32 to vector<1x128xi32>
    %60 = arith.addi %6, %59 : vector<1x128xi32>
    %c0_i32_18 = arith.constant 0 : i32
    %61 = vector.broadcast %c0_i32_18 : i32 to vector<1x128xi32>
    %62 = arith.cmpi sge, %60, %61 : vector<1x128xi32>
    %c100_i32_19 = arith.constant 100 : i32
    %63 = vector.broadcast %c100_i32_19 : i32 to vector<1x128xi32>
    %64 = arith.cmpi slt, %60, %63 : vector<1x128xi32>
    %65 = arith.andi %62, %64 : vector<1x128xi1>
    %cst_20 = arith.constant 0xFF800000 : f32
    %66 = vector.broadcast %cst_20 : f32 to vector<1x128xf32>
    %67 = arith.select %65, %58, %66 : vector<1x128xi1>, vector<1x128xf32>
    %c2 = arith.constant 2 : index
    %c0_21 = arith.constant 0 : index
    %68 = vector.load %arg4[%c2, %c0_21] : memref<8x128xf32, #tpu.memory_space<vmem>>, vector<1x128xf32>
    tpu.vector_store %arg4[%c2, %c0_21], %67 {strides = array<i32>} : memref<8x128xf32, #tpu.memory_space<vmem>>, vector<1x128xf32>,
    %c127_i32 = arith.constant 127 : i32
    %69 = tpu.dynamic_rotate %3 by %c127_i32 dim 1 : vector<32x128xf32>, i32 -> vector<32x128xf32>
    %70 = arith.mulf %1, %69 : vector<32x128xf32>
    %71 = vector.extract_strided_slice %70 {offsets = [0, 0], sizes = [8, 128], strides = [1, 1]} : vector<32x128xf32> to vector<8x128xf32>
    %72 = vector.extract_strided_slice %70 {offsets = [8, 0], sizes = [8, 128], strides = [1, 1]} : vector<32x128xf32> to vector<8x128xf32>
    %73 = arith.addf %71, %72 : vector<8x128xf32>
    %74 = vector.extract_strided_slice %70 {offsets = [16, 0], sizes = [8, 128], strides = [1, 1]} : vector<32x128xf32> to vector<8x128xf32>
    %75 = arith.addf %73, %74 : vector<8x128xf32>
    %76 = vector.extract_strided_slice %70 {offsets = [24, 0], sizes = [8, 128], strides = [1, 1]} : vector<32x128xf32> to vector<8x128xf32>
    %77 = arith.addf %75, %76 : vector<8x128xf32>
    %cst_22 = arith.constant dense<0.000000e+00> : vector<128xf32>
    %78 = vector.multi_reduction <add>, %77, %cst_22 [0] : vector<8x128xf32> to vector<128xf32>
    %79 = vector.shape_cast %78 : vector<128xf32> to vector<1x128xf32>
    %c1_i32_23 = arith.constant 1 : i32
    %80 = vector.broadcast %c1_i32_23 : i32 to vector<1x128xi32>
    %81 = arith.addi %6, %80 : vector<1x128xi32>
    %c0_i32_24 = arith.constant 0 : i32
    %82 = vector.broadcast %c0_i32_24 : i32 to vector<1x128xi32>
    %83 = arith.cmpi sge, %81, %82 : vector<1x128xi32>
    %c100_i32_25 = arith.constant 100 : i32
    %84 = vector.broadcast %c100_i32_25 : i32 to vector<1x128xi32>
    %85 = arith.cmpi slt, %81, %84 : vector<1x128xi32>
    %86 = arith.andi %83, %85 : vector<1x128xi1>
    %cst_26 = arith.constant 0xFF800000 : f32
    %87 = vector.broadcast %cst_26 : f32 to vector<1x128xf32>
    %88 = arith.select %86, %79, %87 : vector<1x128xi1>, vector<1x128xf32>
    %c3 = arith.constant 3 : index
    %c0_27 = arith.constant 0 : index
    %89 = vector.load %arg4[%c3, %c0_27] : memref<8x128xf32, #tpu.memory_space<vmem>>, vector<1x128xf32>
    tpu.vector_store %arg4[%c3, %c0_27], %88 {strides = array<i32>} : memref<8x128xf32, #tpu.memory_space<vmem>>, vector<1x128xf32>,
    %c126_i32 = arith.constant 126 : i32
    %90 = tpu.dynamic_rotate %3 by %c126_i32 dim 1 : vector<32x128xf32>, i32 -> vector<32x128xf32>
    %91 = arith.mulf %1, %90 : vector<32x128xf32>
    %92 = vector.extract_strided_slice %91 {offsets = [0, 0], sizes = [8, 128], strides = [1, 1]} : vector<32x128xf32> to vector<8x128xf32>
    %93 = vector.extract_strided_slice %91 {offsets = [8, 0], sizes = [8, 128], strides = [1, 1]} : vector<32x128xf32> to vector<8x128xf32>
    %94 = arith.addf %92, %93 : vector<8x128xf32>
    %95 = vector.extract_strided_slice %91 {offsets = [16, 0], sizes = [8, 128], strides = [1, 1]} : vector<32x128xf32> to vector<8x128xf32>
    %96 = arith.addf %94, %95 : vector<8x128xf32>
    %97 = vector.extract_strided_slice %91 {offsets = [24, 0], sizes = [8, 128], strides = [1, 1]} : vector<32x128xf32> to vector<8x128xf32>
    %98 = arith.addf %96, %97 : vector<8x128xf32>
    %cst_28 = arith.constant dense<0.000000e+00> : vector<128xf32>
    %99 = vector.multi_reduction <add>, %98, %cst_28 [0] : vector<8x128xf32> to vector<128xf32>
    %100 = vector.shape_cast %99 : vector<128xf32> to vector<1x128xf32>
    %c2_i32_29 = arith.constant 2 : i32
    %101 = vector.broadcast %c2_i32_29 : i32 to vector<1x128xi32>
    %102 = arith.addi %6, %101 : vector<1x128xi32>
    %c0_i32_30 = arith.constant 0 : i32
    %103 = vector.broadcast %c0_i32_30 : i32 to vector<1x128xi32>
    %104 = arith.cmpi sge, %102, %103 : vector<1x128xi32>
    %c100_i32_31 = arith.constant 100 : i32
    %105 = vector.broadcast %c100_i32_31 : i32 to vector<1x128xi32>
    %106 = arith.cmpi slt, %102, %105 : vector<1x128xi32>
    %107 = arith.andi %104, %106 : vector<1x128xi1>
    %cst_32 = arith.constant 0xFF800000 : f32
    %108 = vector.broadcast %cst_32 : f32 to vector<1x128xf32>
    %109 = arith.select %107, %100, %108 : vector<1x128xi1>, vector<1x128xf32>
    %c4 = arith.constant 4 : index
    %c0_33 = arith.constant 0 : index
    %110 = vector.load %arg4[%c4, %c0_33] : memref<8x128xf32, #tpu.memory_space<vmem>>, vector<1x128xf32>
    tpu.vector_store %arg4[%c4, %c0_33], %109 {strides = array<i32>} : memref<8x128xf32, #tpu.memory_space<vmem>>, vector<1x128xf32>,
    %c0_34 = arith.constant 0 : index
    %c0_35 = arith.constant 0 : index
    %111 = vector.load %arg4[%c0_34, %c0_35] : memref<8x128xf32, #tpu.memory_space<vmem>>, vector<8x128xf32>
    %cst_36 = arith.constant dense<0xFF800000> : vector<128xf32>
    %112 = vector.multi_reduction <maximumf>, %111, %cst_36 [0] : vector<8x128xf32> to vector<128xf32>
    %113 = vector.shape_cast %112 : vector<128xf32> to vector<1x128xf32>
    %114 = vector.broadcast %113 : vector<1x128xf32> to vector<8x128xf32>
    %115 = arith.subf %111, %114 : vector<8x128xf32>
    %116 = math.exp %115 : vector<8x128xf32>
    %cst_37 = arith.constant dense<0.000000e+00> : vector<128xf32>
    %117 = vector.multi_reduction <add>, %116, %cst_37 [0] : vector<8x128xf32> to vector<128xf32>
    %118 = vector.shape_cast %117 : vector<128xf32> to vector<1x128xf32>
    %119 = tpu.reciprocal %118 : vector<1x128xf32> -> vector<1x128xf32>
    %120 = vector.broadcast %119 : vector<1x128xf32> to vector<8x128xf32>
    %121 = arith.mulf %116, %120 : vector<8x128xf32>
    %c0_38 = arith.constant 0 : index
    %c0_39 = arith.constant 0 : index
    %c0_40 = arith.constant 0 : index
    %122 = vector.load %arg3[%c0_38, %c0_39, %c0_40] : memref<1x8x128xf32, #tpu.memory_space<vmem>>, vector<1x8x128xf32>
    %123 = vector.shape_cast %122 : vector<1x8x128xf32> to vector<8x128xf32>
    %124 = vector.shape_cast %121 : vector<8x128xf32> to vector<1x8x128xf32>
    tpu.vector_store %arg3[%c0_38, %c0_39, %c0_40], %124 {strides = array<i32>} : memref<1x8x128xf32, #tpu.memory_space<vmem>>, vector<1x8x128xf32>,
    return
  }
  func.func @transform_0(%arg0: i32) -> (i32, i32, i32) {
    %c0_i32 = arith.constant 0 : i32
    %c0_i32_0 = arith.constant 0 : i32
    %c0_i32_1 = arith.constant 0 : i32
    return %arg0, %c0_i32, %c0_i32_0 : i32, i32, i32
  }
  func.func @transform_1(%arg0: i32) -> (i32, i32, i32) {
    %c0_i32 = arith.constant 0 : i32
    %c0_i32_0 = arith.constant 0 : i32
    %c0_i32_1 = arith.constant 0 : i32
    return %arg0, %c0_i32, %c0_i32_0 : i32, i32, i32
  }
  func.func @transform_2(%arg0: i32) -> (i32, i32, i32) {
    %c0_i32 = arith.constant 0 : i32
    %c0_i32_0 = arith.constant 0 : i32
    %c0_i32_1 = arith.constant 0 : i32
    return %arg0, %c0_i32, %c0_i32_0 : i32, i32, i32
  }
}

</mosaic_0001>

<llo_original>
// kernel: tpu_custom_call.1
$region0: #{tpu_custom_call.1}
  #allocation0 [shape = 'u32[]', space=smem, size = 0x4, offset = 0x4, fixed_abs, tag = 'smem constant byte address 0x4 - core index']
  #allocation1 [shape = 'u32[144,128]{1,0:T(1,128)}', space=vmem, size = 0x12000, scoped, tag = 'internal scratch']
  #allocation2 [shape = 'f32[8,128]{1,0:T(8,128)}', space=vmem, size = 0x1000, scoped, tag = 'scratch operand']
  %s0 = inlined_call_operand.hbm [shape: f32[8,32,128], index: 0, kind: input, shape index: {}]
  %s1 = inlined_call_operand.hbm [shape: f32[8,32,128], index: 1, kind: input, shape index: {}]
  %s2 = inlined_call_operand.hbm [shape: f32[8,8,128], index: 2, kind: output, shape index: {}]
  %s3 = sld [smem:[#allocation0]]
  $region49: #{tpu_custom_call.1} parent=0
    _
  %s5 = ssub.s32 1, %s3
  %s6 = scalar_select 0, %s5, %s3
  $region1: #{tpu_custom_call.1} parent=0
    #allocation3 [shape = 'u8[32768]{0}', space=vmem, size = 0x8000, scoped, tag = 'input window, operand 0']
    #allocation4 [shape = 's32[2]{0}', space=sflag, size = 0x8, scoped, tag = 'scoped memory for tpu_custom_call.1']
    #allocation5 [shape = 's32[2]{0}', space=sflag, size = 0x8, scoped, tag = 'scoped memory for tpu_custom_call.1']
    #allocation6 [shape = 'u8[32768]{0}', space=vmem, size = 0x8000, scoped, tag = 'input window, operand 1']
    #allocation7 [shape = 's32[2]{0}', space=sflag, size = 0x8, scoped, tag = 'scoped memory for tpu_custom_call.1']
    #allocation8 [shape = 'u8[8192]{0}', space=vmem, size = 0x2000, scoped, tag = 'output window, operand 0']
    %7 = vsyncpa [#allocation4], 0
    %s8 = scalar_lea.sflag [#allocation4], 1
    %9 = vsyncpa %s8, 0
    %10 = vsyncpa [#allocation7], 0
    %s11 = scalar_lea.sflag [#allocation7], 1
    %12 = vsyncpa %s11, 0
    %13 = vsyncpa [#allocation5], 0
    %s14 = scalar_lea.sflag [#allocation5], 1
    %15 = vsyncpa %s14, 0
    loop: start=0, step=1, limit=10
    $region2: #{tpu_custom_call.1} parent=1 // loop_pre_header
      _
    $region3: #{tpu_custom_call.1} parent=1 // loop_header
      %s17 = sphi 0, %s21
      %p18 = scmp.ge.s32.totalorder %s17, 10
      %s27 = sphi 0, %s29
      %s30 = sphi 0, %s27
      %s31 = sphi 0, %s30
      %s47 = sphi 0, %s31
      %s53 = sphi 0, %s55
      %s56 = sphi 0, %s53
      %s57 = sphi 0, %s56
      %s73 = sphi 0, %s57
      %s79 = sphi 0, %s81
      %s82 = sphi 0, %s79
      %s83 = sphi 0, %s82
      %s99 = sphi 0, %s83
    $region4: #{tpu_custom_call.1} parent=1 // loop_header_branch
      %20 = sbr.rel (%p18) target = $region8
    $region5: #{tpu_custom_call.1} parent=1 // loop_body
      %s22 = ssub.s32 %s17, 1
      %s23 = ssub.s32 %s17, 2
      %s24 = sadd.s32 %s17, 1
      %s25 = ssub.s32 %s17, %s24
      %p26 = scmp.eq.s32.totalorder %s25, 0
      %s28 = sadd.s32 %s27, 1
      %s29 = scalar_select %p26, %s27, %s28
      %p32 = pneg %p26
      %p33 = scmp.eq.s32.totalorder %s17, 7
      %p34 = por %p32, %p33
      %p35 = scmp.ne.s32.totalorder %s27, %s30
      %p36 = scmp.eq.s32.totalorder %s17, 0
      %p37 = por %p35, %p36
      %p38 = scmp.ne.s32.totalorder %s27, %s30
      %p39 = scmp.eq.s32.totalorder %s22, 7
      %p40 = por %p38, %p39
      %p41 = scmp.ne.s32.totalorder %s30, %s31
      %p42 = scmp.eq.s32.totalorder %s22, 0
      %p43 = por %p41, %p42
      %p44 = scmp.ne.s32.totalorder %s30, %s31
      %p45 = scmp.eq.s32.totalorder %s23, 7
      %p46 = por %p44, %p45
      %p48 = scmp.ne.s32.totalorder %s31, %s47
      %p49 = scmp.eq.s32.totalorder %s23, 0
      %p50 = por %p48, %p49
      %s51 = ssub.s32 %s17, %s24
      %p52 = scmp.eq.s32.totalorder %s51, 0
      %s54 = sadd.s32 %s53, 1
      %s55 = scalar_select %p52, %s53, %s54
      %p58 = pneg %p52
      %p59 = scmp.eq.s32.totalorder %s17, 7
      %p60 = por %p58, %p59
      %p61 = scmp.ne.s32.totalorder %s53, %s56
      %p62 = scmp.eq.s32.totalorder %s17, 0
      %p63 = por %p61, %p62
      %p64 = scmp.ne.s32.totalorder %s53, %s56
      %p65 = scmp.eq.s32.totalorder %s22, 7
      %p66 = por %p64, %p65
      %p67 = scmp.ne.s32.totalorder %s56, %s57
      %p68 = scmp.eq.s32.totalorder %s22, 0
      %p69 = por %p67, %p68
      %p70 = scmp.ne.s32.totalorder %s56, %s57
      %p71 = scmp.eq.s32.totalorder %s23, 7
      %p72 = por %p70, %p71
      %p74 = scmp.ne.s32.totalorder %s57, %s73
      %p75 = scmp.eq.s32.totalorder %s23, 0
      %p76 = por %p74, %p75
      %s77 = ssub.s32 %s17, %s24
      %p78 = scmp.eq.s32.totalorder %s77, 0
      %s80 = sadd.s32 %s79, 1
      %s81 = scalar_select %p78, %s79, %s80
      %p84 = pneg %p78
      %p85 = scmp.eq.s32.totalorder %s17, 7
      %p86 = por %p84, %p85
      %p87 = scmp.ne.s32.totalorder %s79, %s82
      %p88 = scmp.eq.s32.totalorder %s17, 0
      %p89 = por %p87, %p88
      %p90 = scmp.ne.s32.totalorder %s79, %s82
      %p91 = scmp.eq.s32.totalorder %s22, 7
      %p92 = por %p90, %p91
      %p93 = scmp.ne.s32.totalorder %s82, %s83
      %p94 = scmp.eq.s32.totalorder %s22, 0
      %p95 = por %p93, %p94
      %p96 = scmp.ne.s32.totalorder %s82, %s83
      %p97 = scmp.eq.s32.totalorder %s23, 7
      %p98 = por %p96, %p97
      %p100 = scmp.ne.s32.totalorder %s83, %s99
      %p101 = scmp.eq.s32.totalorder %s23, 0
      %p102 = por %p100, %p101
      %p103 = scmp.le.s32.totalorder 1, %s17
      %p104 = scmp.lt.s32.totalorder %s17, 9
      %p105 = pnand %p103, %p104
      %p106 = pneg %p105
      // Predicated region
      $region9: #{tpu_custom_call.1} parent=5 // pred_check
        _
      $region10: #{tpu_custom_call.1} parent=5 // pred_check_branch
        %108 = sbr.rel (%p105) target = $region12
      $region11: #{tpu_custom_call.1} parent=5 // pred_region
        %s109 = ssub.s32 %s17, 1
      $region12: #{tpu_custom_call.1} parent=5 // pred_fallthru
        _
      %p110 = scmp.lt.s32.totalorder %s17, 8
      // Predicated region
      $region13: #{tpu_custom_call.1} parent=5 // pred_check
        %p111 = pneg %p110
      $region14: #{tpu_custom_call.1} parent=5 // pred_check_branch
        %113 = sbr.rel (%p111) target = $region16
      $region15: #{tpu_custom_call.1} parent=5 // pred_region
        // Predicated region
        $region17: #{tpu_custom_call.1} parent=15 // pred_check
          %p114 = pneg %p37
        $region18: #{tpu_custom_call.1} parent=15 // pred_check_branch
          %116 = sbr.rel (%p114) target = $region20
        $region19: #{tpu_custom_call.1} parent=15 // pred_region
          %s117 = sand.u32 %s27, 1
          %s118 = scalar_lea.sflag [#allocation4], %s117
          %s119 = sand.u32 %s27, 1
          %s120 = smul.addr %s119, 32
          %s121 = scalar_lea.vmem [#allocation3], %s120
          %s123 = ssub.s32 512, 512
          %124 = vsyncadd %s118, %s123
          %s125 = smul.addr %s17, 4
          %s126 = smul.addr %s125, 128
          %s127 = scalar_lea.hbm %s0, %s126
          %s128 = sshll.u32 %s121, 4
          %s129 = int_to_ptr.vmem [resolvable:$true] %s128
          %134 = dma.hbm_to_vmem [thread:$0]  %s127, 512, %s129, %s118, 128, 128, 8
        $region20: #{tpu_custom_call.1} parent=15 // pred_fallthru
          _
        // Predicated region
        $region21: #{tpu_custom_call.1} parent=15 // pred_check
          %p135 = pneg %p63
        $region22: #{tpu_custom_call.1} parent=15 // pred_check_branch
          %137 = sbr.rel (%p135) target = $region24
        $region23: #{tpu_custom_call.1} parent=15 // pred_region
          %s138 = sand.u32 %s53, 1
          %s139 = scalar_lea.sflag [#allocation7], %s138
          %s140 = sand.u32 %s53, 1
          %s141 = smul.addr %s140, 32
          %s142 = scalar_lea.vmem [#allocation6], %s141
          %s144 = ssub.s32 512, 512
          %145 = vsyncadd %s139, %s144
          %s146 = smul.addr %s17, 4
          %s147 = smul.addr %s146, 128
          %s148 = scalar_lea.hbm %s1, %s147
          %s149 = sshll.u32 %s142, 4
          %s150 = int_to_ptr.vmem [resolvable:$true] %s149
          %155 = dma.hbm_to_vmem [thread:$0]  %s148, 512, %s150, %s139, 128, 128, 8
        $region24: #{tpu_custom_call.1} parent=15 // pred_fallthru
          _
      $region16: #{tpu_custom_call.1} parent=5 // pred_fallthru
        _
      %p156 = scmp.le.s32.totalorder 1, %s17
      %p157 = scmp.lt.s32.totalorder %s17, 9
      %p158 = pnand %p156, %p157
      %p159 = pneg %p158
      // Predicated region
      $region25: #{tpu_custom_call.1} parent=5 // pred_check
        _
      $region26: #{tpu_custom_call.1} parent=5 // pred_check_branch
        %161 = sbr.rel (%p158) target = $region28
      $region27: #{tpu_custom_call.1} parent=5 // pred_region
        %s162 = ssub.s32 %s17, 1
        %s163 = sand.u32 %s30, 1
        %s164 = scalar_lea.sflag [#allocation4], %s163
        %s165 = sand.u32 %s30, 1
        %s166 = smul.addr %s165, 32
        %s167 = scalar_lea.vmem [#allocation3], %s166
        // Predicated region
        $region29: #{tpu_custom_call.1} parent=27 // pred_check
          %p168 = pneg %p43
        $region30: #{tpu_custom_call.1} parent=27 // pred_check_branch
          %170 = sbr.rel (%p168) target = $region32
        $region31: #{tpu_custom_call.1} parent=27 // pred_region
          %171 = dma.done %s164, 512
        $region32: #{tpu_custom_call.1} parent=27 // pred_fallthru
          _
        %s172 = sand.u32 %s56, 1
        %s173 = scalar_lea.sflag [#allocation7], %s172
        %s174 = sand.u32 %s56, 1
        %s175 = smul.addr %s174, 32
        %s176 = scalar_lea.vmem [#allocation6], %s175
        // Predicated region
        $region33: #{tpu_custom_call.1} parent=27 // pred_check
          %p177 = pneg %p69
        $region34: #{tpu_custom_call.1} parent=27 // pred_check_branch
          %179 = sbr.rel (%p177) target = $region36
        $region35: #{tpu_custom_call.1} parent=27 // pred_region
          %180 = dma.done %s173, 512
        $region36: #{tpu_custom_call.1} parent=27 // pred_fallthru
          _
        %s181 = sand.u32 %s30, 1
        %s182 = scalar_lea.sflag [#allocation4], %s181
        %s183 = sand.u32 %s30, 1
        %s184 = smul.addr %s183, 32
        %s185 = scalar_lea.vmem [#allocation3], %s184
        %p186 = pneg %p43
        %p187 = pneg %p40
        %s188 = sand.u32 %s56, 1
        %s189 = scalar_lea.sflag [#allocation7], %s188
        %s190 = sand.u32 %s56, 1
        %s191 = smul.addr %s190, 32
        %s192 = scalar_lea.vmem [#allocation6], %s191
        %p193 = pneg %p69
        %p194 = pneg %p66
        %p195 = pneg %p95
        %p196 = pneg %p92
        %s197 = sand.u32 %s82, 1
        %s198 = scalar_lea.sflag [#allocation5], %s197
        %s199 = sand.u32 %s82, 1
        %s200 = smul.addr %s199, 8
        %s201 = scalar_lea.vmem [#allocation8], %s200
        %v202 = vld [vmem:[%s167] sm:$0xff]
        %v203 = vld [vmem:[%s167 + $0x8] sm:$0xff]
        %v204 = vld [vmem:[%s167 + $0x10] sm:$0xff]
        %v205 = vld [vmem:[%s167 + $0x18] sm:$0xff]
        %v206 = vld [vmem:[%s176] sm:$0xff]
        %v207 = vld [vmem:[%s176 + $0x8] sm:$0xff]
        %v208 = vld [vmem:[%s176 + $0x10] sm:$0xff]
        %v209 = vld [vmem:[%s176 + $0x18] sm:$0xff]
        %210 = vst [vmem:[#allocation2] sm:$0xff] -inf
        %v211 = vlaneseq
        %v212 = vand.u32 %v211, 127
        %213 = vrot.lane.b32.xlu0 %v206, 2
        %v214 = vpop.permute.xlu0 %213
        %215 = vrot.lane.b32.xlu0 %v207, 2
        %v216 = vpop.permute.xlu0 %215
        %217 = vrot.lane.b32.xlu0 %v208, 2
        %v218 = vpop.permute.xlu0 %217
        %219 = vrot.lane.b32.xlu0 %v209, 2
        %v220 = vpop.permute.xlu0 %219
        %v221 = vmul.f32 %v202, %v214
        %v222 = vmul.f32 %v203, %v216
        %v223 = vmul.f32 %v204, %v218
        %v224 = vmul.f32 %v205, %v220
        %v225 = vadd.f32 %v221, %v222
        %v226 = vadd.f32 %v225, %v223
        %v227 = vadd.f32 %v226, %v224
        %v228 = vrot.slane %v227, 4
        %v229 = vadd.f32 %v227, %v228
        %v230 = vrot.slane %v229, 2
        %v231 = vadd.f32 %v229, %v230
        %v232 = vrot.slane %v231, 1
        %v233 = vadd.f32 %v231, %v232
        %v234 = vadd.s32 %v212, 4294967294
        %vm235 = vcmp.ge.s32.totalorder %v234, 0
        %vm236 = vcmp.lt.s32.totalorder %v234, 100
        %vm237 = vmand %vm235, %vm236
        %v238 = vsel %vm237, %v233, -inf
        %239 = vst [vmem:[#allocation2] sm:$0x1] %v238
        %240 = vrot.lane.b32.xlu0 %v206, 1
        %v241 = vpop.permute.xlu0 %240
        %242 = vrot.lane.b32.xlu0 %v207, 1
        %v243 = vpop.permute.xlu0 %242
        %244 = vrot.lane.b32.xlu0 %v208, 1
        %v245 = vpop.permute.xlu0 %244
        %246 = vrot.lane.b32.xlu0 %v209, 1
        %v247 = vpop.permute.xlu0 %246
        %v248 = vmul.f32 %v202, %v241
        %v249 = vmul.f32 %v203, %v243
        %v250 = vmul.f32 %v204, %v245
        %v251 = vmul.f32 %v205, %v247
        %v252 = vadd.f32 %v248, %v249
        %v253 = vadd.f32 %v252, %v250
        %v254 = vadd.f32 %v253, %v251
        %v255 = vrot.slane %v254, 4
        %v256 = vadd.f32 %v254, %v255
        %v257 = vrot.slane %v256, 2
        %v258 = vadd.f32 %v256, %v257
        %v259 = vrot.slane %v258, 1
        %v260 = vadd.f32 %v258, %v259
        %v261 = vadd.s32 %v212, 4294967295
        %vm262 = vcmp.ge.s32.totalorder %v261, 0
        %vm263 = vcmp.lt.s32.totalorder %v261, 100
        %vm264 = vmand %vm262, %vm263
        %v265 = vsel %vm264, %v260, -inf
        %266 = vst [vmem:[#allocation2 + $0x1] sm:$0x1] %v265
        %v267 = vmul.f32 %v202, %v206
        %v268 = vmul.f32 %v203, %v207
        %v269 = vmul.f32 %v204, %v208
        %v270 = vmul.f32 %v205, %v209
        %v271 = vadd.f32 %v267, %v268
        %v272 = vadd.f32 %v271, %v269
        %v273 = vadd.f32 %v272, %v270
        %v274 = vrot.slane %v273, 4
        %v275 = vadd.f32 %v273, %v274
        %v276 = vrot.slane %v275, 2
        %v277 = vadd.f32 %v275, %v276
        %v278 = vrot.slane %v277, 1
        %v279 = vadd.f32 %v277, %v278
        %vm280 = vcmp.ge.s32.totalorder %v212, 0
        %vm281 = vcmp.lt.s32.totalorder %v212, 100
        %vm282 = vmand %vm280, %vm281
        %v283 = vsel %vm282, %v279, -inf
        %284 = vst [vmem:[#allocation2 + $0x2] sm:$0x1] %v283
        %285 = vrot.lane.b32.xlu0 %v206, 127
        %v286 = vpop.permute.xlu0 %285
        %287 = vrot.lane.b32.xlu0 %v207, 127
        %v288 = vpop.permute.xlu0 %287
        %289 = vrot.lane.b32.xlu0 %v208, 127
        %v290 = vpop.permute.xlu0 %289
        %291 = vrot.lane.b32.xlu0 %v209, 127
        %v292 = vpop.permute.xlu0 %291
        %v293 = vmul.f32 %v202, %v286
        %v294 = vmul.f32 %v203, %v288
        %v295 = vmul.f32 %v204, %v290
        %v296 = vmul.f32 %v205, %v292
        %v297 = vadd.f32 %v293, %v294
        %v298 = vadd.f32 %v297, %v295
        %v299 = vadd.f32 %v298, %v296
        %v300 = vrot.slane %v299, 4
        %v301 = vadd.f32 %v299, %v300
        %v302 = vrot.slane %v301, 2
        %v303 = vadd.f32 %v301, %v302
        %v304 = vrot.slane %v303, 1
        %v305 = vadd.f32 %v303, %v304
        %v306 = vadd.s32 %v212, 1
        %vm307 = vcmp.ge.s32.totalorder %v306, 0
        %vm308 = vcmp.lt.s32.totalorder %v306, 100
        %vm309 = vmand %vm307, %vm308
        %v310 = vsel %vm309, %v305, -inf
        %311 = vst [vmem:[#allocation2 + $0x3] sm:$0x1] %v310
        %312 = vrot.lane.b32.xlu0 %v206, 126
        %v313 = vpop.permute.xlu0 %312
        %314 = vrot.lane.b32.xlu0 %v207, 126
        %v315 = vpop.permute.xlu0 %314
        %316 = vrot.lane.b32.xlu0 %v208, 126
        %v317 = vpop.permute.xlu0 %316
        %318 = vrot.lane.b32.xlu0 %v209, 126
        %v319 = vpop.permute.xlu0 %318
        %v320 = vmul.f32 %v202, %v313
        %v321 = vmul.f32 %v203, %v315
        %v322 = vmul.f32 %v204, %v317
        %v323 = vmul.f32 %v205, %v319
        %v324 = vadd.f32 %v320, %v321
        %v325 = vadd.f32 %v324, %v322
        %v326 = vadd.f32 %v325, %v323
        %v327 = vrot.slane %v326, 4
        %v328 = vadd.f32 %v326, %v327
        %v329 = vrot.slane %v328, 2
        %v330 = vadd.f32 %v328, %v329
        %v331 = vrot.slane %v330, 1
        %v332 = vadd.f32 %v330, %v331
        %v333 = vadd.s32 %v212, 2
        %vm334 = vcmp.ge.s32.totalorder %v333, 0
        %vm335 = vcmp.lt.s32.totalorder %v333, 100
        %vm336 = vmand %vm334, %vm335
        %v337 = vsel %vm336, %v332, -inf
        %338 = vst [vmem:[#allocation2 + $0x4] sm:$0x1] %v337
        %v339 = vld [vmem:[#allocation2] sm:$0xff]
        %v340 = vrot.slane %v339, 4
        %v341 = vmax.f32 %v339, %v340
        %v342 = vrot.slane %v341, 2
        %v343 = vmax.f32 %v341, %v342
        %v344 = vrot.slane %v343, 1
        %v345 = vmax.f32 %v343, %v344
        %v346 = vsub.f32 %v339, %v345
        %v347 = vmul.f32 %v346, 1.442695
        %v348 = vpow.pop %v347
        %v349 = vrot.slane %v348, 4
        %v350 = vadd.f32 %v348, %v349
        %v351 = vrot.slane %v350, 2
        %v352 = vadd.f32 %v350, %v351
        %v353 = vrot.slane %v352, 1
        %v354 = vadd.f32 %v352, %v353
        %v355 = vrcp.pop %v354
        %v356 = vmul.f32 %v348, %v355
        %357 = vst [vmem:[%s201] sm:$0xff] %v356
        %s358 = sand.u32 %s82, 1
        %s359 = scalar_lea.sflag [#allocation5], %s358
        %s360 = sand.u32 %s82, 1
        %s361 = smul.addr %s360, 8
        %s362 = scalar_lea.vmem [#allocation8], %s361
        // Predicated region
        $region37: #{tpu_custom_call.1} parent=27 // pred_check
          %p363 = pneg %p92
        $region38: #{tpu_custom_call.1} parent=27 // pred_check_branch
          %365 = sbr.rel (%p363) target = $region40
        $region39: #{tpu_custom_call.1} parent=27 // pred_region
          %s367 = ssub.s32 128, 128
          %368 = vsyncadd %s359, %s367
          %s369 = smul.addr %s22, 128
          %s370 = scalar_lea.hbm %s2, %s369
          %s372 = sshll.u32 %s362, 4
          %s373 = int_to_ptr.vmem [resolvable:$true] %s372
          %375 = dma.vmem_to_hbm [thread:$0]  %s373, 128, %s370, %s359
        $region40: #{tpu_custom_call.1} parent=27 // pred_fallthru
          _
      $region28: #{tpu_custom_call.1} parent=5 // pred_fallthru
        _
      %p376 = scmp.le.s32.totalorder 2, %s17
      // Predicated region
      $region41: #{tpu_custom_call.1} parent=5 // pred_check
        %p377 = pneg %p376
      $region42: #{tpu_custom_call.1} parent=5 // pred_check_branch
        %379 = sbr.rel (%p377) target = $region44
      $region43: #{tpu_custom_call.1} parent=5 // pred_region
        %s380 = ssub.s32 %s17, 2
        // Predicated region
        $region45: #{tpu_custom_call.1} parent=43 // pred_check
          %p381 = pneg %p98
        $region46: #{tpu_custom_call.1} parent=43 // pred_check_branch
          %383 = sbr.rel (%p381) target = $region48
        $region47: #{tpu_custom_call.1} parent=43 // pred_region
          %s384 = sand.u32 %s83, 1
          %s385 = scalar_lea.sflag [#allocation5], %s384
          %s386 = sand.u32 %s83, 1
          %s387 = smul.addr %s386, 8
          %s388 = scalar_lea.vmem [#allocation8], %s387
          %389 = dma.done %s385, 128
        $region48: #{tpu_custom_call.1} parent=43 // pred_fallthru
          _
      $region44: #{tpu_custom_call.1} parent=5 // pred_fallthru
        _
    $region6: #{tpu_custom_call.1} parent=1 // loop_footer
      %s21 = sadd.s32 1, %s17
    $region7: #{tpu_custom_call.1} parent=1 // loop_footer_branch
      %16 = sbr.rel target = $region3
    $region8: #{tpu_custom_call.1} parent=1 // loop_exit
      _
    %390 = vsyncpa [#allocation4], 1
    %s391 = scalar_lea.sflag [#allocation4], 1
    %392 = vsyncpa %s391, 1
    %393 = vsyncpa [#allocation7], 1
    %s394 = scalar_lea.sflag [#allocation7], 1
    %395 = vsyncpa %s394, 1
    %396 = vsyncpa [#allocation5], 1
    %s397 = scalar_lea.sflag [#allocation5], 1
    %398 = vsyncpa %s397, 1

</llo_original>
